<compile_context>
chip_gen: v7x
topology: tpu7x:2x2x1
jax: 0.10.0
libtpu: 0.0.40
codegen_flags: <defaults>
</compile_context>

<pallas_src>
import functools

import jax
import jax.numpy as jnp
from jax.experimental import pallas as pl
from jax.experimental.pallas import tpu as pltpu

BN_EPS = 1e-5
LANE = 128
SUBLANE = 8


def _round_up(x, m):
    return ((x + m - 1) // m) * m


def _pad2(a, shape):
    return jnp.pad(a, [(0, t - s) for s, t in zip(a.shape, shape)])


def _vmem_capacity():
    try:
        return int(pltpu.get_tpu_info().vmem_capacity_bytes)
    except Exception:
        return 64 << 20  # conservative fallback (v7x per-TC VMEM)


# --------------------------------------------------------------------------- #
# Kernels
# --------------------------------------------------------------------------- #
def _predictor_single_kernel(x_ref, w1_ref, gamma_ref, beta_ref, w2_ref, b2_ref,
                             out_ref, *, n_true):
    """Small-N fast path: whole batch resident, single pass, no recompute."""
    h = jnp.dot(x_ref[...], w1_ref[...], preferred_element_type=jnp.float32)
    inv_n = 1.0 / n_true                                   # true batch size
    mean = jnp.sum(h, axis=0, keepdims=True) * inv_n
    var = jnp.maximum(jnp.sum(h * h, axis=0, keepdims=True) * inv_n - mean * mean, 0.0)
    scale = jax.lax.rsqrt(var + BN_EPS) * gamma_ref[...].astype(jnp.float32)
    shift = beta_ref[...].astype(jnp.float32) - mean * scale
    h = jnp.maximum(h * scale + shift, 0.0)                # fused BN affine + ReLU
    out = jnp.dot(h.astype(w2_ref.dtype), w2_ref[...],
                  preferred_element_type=jnp.float32)
    out_ref[...] = (out + b2_ref[...].astype(jnp.float32)).astype(out_ref.dtype)


def _predictor_tiled_kernel(n_ref, x_ref, w1_ref, gamma_ref, beta_ref, w2_ref,
                            b2_ref, out_ref, s0_ref, s1_ref, *maybe_h,
                            tn, use_hcache):
    """Two-pass tiled path.

    grid = (2, num_n_tiles): axis 0 is the pass (0: stats, 1: apply), axis 1
    walks the batch tiles. s0/s1 are (8, Hp) f32 VMEM scratch holding
    per-sublane partial sum / sum-of-squares during pass 0; after _finalize
    row 0 holds the folded BN scale / shift. maybe_h optionally holds the
    (num_tiles, tn, Hp) Linear1 cache.
    """
    h_cache = maybe_h[0] if use_hcache else None
    pass_id = pl.program_id(0)
    nt = pl.program_id(1)
    last_nt = pl.num_programs(1) - 1

    @pl.when(pass_id == 0)
    def _stats_pass():
        @pl.when(nt == 0)
        def _init():
            s0_ref[...] = jnp.zeros_like(s0_ref)
            s1_ref[...] = jnp.zeros_like(s1_ref)

        # Linear1 without bias: a per-column constant is exactly cancelled by
        # train-mode BN's mean subtraction. Padded rows of x are zero -> they
        # contribute nothing to the sums.
        h = jnp.dot(x_ref[...], w1_ref[...], preferred_element_type=jnp.float32)
        if use_hcache:
            h_cache[nt] = h
        # Fold the (tn, Hp) tile into 8 sublane-partial rows: plain VPU adds +
        # full-sublane scratch stores; the cross-sublane reduce happens once,
        # in _finalize.
        hp = h.reshape(tn // SUBLANE, SUBLANE, h.shape[-1])
        s0_ref[...] += jnp.sum(hp, axis=0)
        s1_ref[...] += jnp.sum(hp * hp, axis=0)

        @pl.when(nt == last_nt)
        def _finalize():
            inv_n = 1.0 / n_ref[0].astype(jnp.float32)     # true batch size (SMEM)
            mean = jnp.sum(s0_ref[...], axis=0, keepdims=True) * inv_n
            var = jnp.maximum(
                jnp.sum(s1_ref[...], axis=0, keepdims=True) * inv_n - mean * mean, 0.0)
            scale = jax.lax.rsqrt(var + BN_EPS) * gamma_ref[...].astype(jnp.float32)
            shift = beta_ref[...].astype(jnp.float32) - mean * scale
            s0_ref[0:1, :] = scale                         # reuse scratch for pass 1
            s1_ref[0:1, :] = shift

    @pl.when(pass_id == 1)
    def _apply_pass():
        if use_hcache:
            h = h_cache[nt]                                # reuse cached Linear1
        else:
            h = jnp.dot(x_ref[...], w1_ref[...], preferred_element_type=jnp.float32)
        h = jnp.maximum(h * s0_ref[0:1, :] + s1_ref[0:1, :], 0.0)
        out = jnp.dot(h.astype(w2_ref.dtype), w2_ref[...],
                      preferred_element_type=jnp.float32)
        out_ref[...] = (out + b2_ref[...].astype(jnp.float32)).astype(out_ref.dtype)


# --------------------------------------------------------------------------- #
# Wrapper
# --------------------------------------------------------------------------- #
def predictor_forward(x, params, *, tn=None, force_tiled=False, use_hcache=None,
                      bf16_matmul=False):
    """x: (N, dim). params: w1 (D,H), gamma/beta (1,H), w2 (H,P), b2 (1,P).

    params may also contain 'b1'; it is intentionally ignored (train-mode BN
    cancels it exactly). bf16_matmul casts MXU operands to bf16 (numerics-
    affecting; accumulation stays f32)."""
    w1 = params["w1"]
    gamma, beta = params["gamma"], params["beta"]
    w2, b2 = params["w2"], params["b2"]

    N, D = x.shape
    H = w1.shape[1]
    P = w2.shape[1]

    # Lane-dense padding of all feature dims to multiples of 128.
    Dp, Hp, Pp = (_round_up(d, LANE) for d in (D, H, P))

    mm_dtype = jnp.bfloat16 if bf16_matmul else w1.dtype
    x_mm_dtype = jnp.bfloat16 if bf16_matmul else x.dtype
    wbytes = jnp.dtype(mm_dtype).itemsize

    # --- VMEM planning --------------------------------------------------- #
    cap = _vmem_capacity()
    budget = int(cap * 0.80)
    weights_bytes = (Dp * Hp + Hp * Pp) * wbytes + (2 * Hp + Pp) * 4  # single-buffered
    stats_bytes = 2 * SUBLANE * Hp * 4
    N8 = _round_up(N, SUBLANE)

    # Zero-padding is load-bearing: padded H features get scale=shift=0 through
    # BN (gamma/beta padded with ZEROS), padded batch rows contribute 0 to the
    # BN sums. Do not change the pad value.
    w1_p = _pad2(w1.astype(mm_dtype), (Dp, Hp))
    w2_p = _pad2(w2.astype(mm_dtype), (Hp, Pp))
    gamma_p = _pad2(gamma.astype(jnp.float32), (1, Hp))
    beta_p = _pad2(beta.astype(jnp.float32), (1, Hp))
    b2_p = _pad2(b2.astype(jnp.float32), (1, Pp))

    # --- Small-N fast path: single grid step, single pass ----------------- #
    fast_foot = weights_bytes + N8 * (Dp + Pp) * 4 + 3 * N8 * Hp * 4
    use_fast = (not force_tiled) and tn is None and N8 <= 1024 and fast_foot <= budget

    if use_fast:
        Np = N8
        x_p = _pad2(x.astype(x_mm_dtype), (Np, Dp))
        vmem_limit = int(min(cap, max(fast_foot * 1.5 + (4 << 20), 32 << 20)))
        kernel = functools.partial(_predictor_single_kernel, n_true=float(N))
        out_p = pl.pallas_call(
            kernel,
            out_shape=jax.ShapeDtypeStruct((Np, Pp), x.dtype),
            grid=(1,),
            in_specs=[
                pl.BlockSpec((Np, Dp), lambda i: (0, 0)),
                pl.BlockSpec((Dp, Hp), lambda i: (0, 0), pipeline_mode=pl.Buffered(1)),
                pl.BlockSpec((1, Hp), lambda i: (0, 0), pipeline_mode=pl.Buffered(1)),
                pl.BlockSpec((1, Hp), lambda i: (0, 0), pipeline_mode=pl.Buffered(1)),
                pl.BlockSpec((Hp, Pp), lambda i: (0, 0), pipeline_mode=pl.Buffered(1)),
                pl.BlockSpec((1, Pp), lambda i: (0, 0), pipeline_mode=pl.Buffered(1)),
            ],
            out_specs=pl.BlockSpec((Np, Pp), lambda i: (0, 0)),
            compiler_params=pltpu.CompilerParams(
                dimension_semantics=("arbitrary",),
                vmem_limit_bytes=vmem_limit),
        )(x_p, w1_p, gamma_p, beta_p, w2_p, b2_p)
        return out_p[:N, :P]

    # --- Tiled two-pass path ---------------------------------------------- #
    tn_cap = 512 if cap >= (96 << 20) else 256   # bigger batch tiles on 128 MiB parts
    if tn is not None:
        tsel = max(SUBLANE, _round_up(min(tn, N8), SUBLANE))
    else:
        tsel = min(tn_cap, N8)
        while True:
            foot = (weights_bytes + stats_bytes
                    + 2 * tsel * (Dp + Pp) * 4 + 3 * tsel * Hp * 4)
            if foot <= budget or tsel <= SUBLANE:
                break
            tsel = max(SUBLANE, (tsel // 2) // SUBLANE * SUBLANE)

    foot = (weights_bytes + stats_bytes
            + 2 * tsel * (Dp + Pp) * 4 + 3 * tsel * Hp * 4)
    Np = _round_up(N, tsel)
    nnt = Np // tsel
    hcache_bytes = Np * Hp * 4
    if use_hcache is None:
        use_hcache = (foot + hcache_bytes) <= budget
    total = foot + (hcache_bytes if use_hcache else 0)
    vmem_limit = int(min(cap, max(total * 1.5 + (4 << 20), 32 << 20)))

    x_p = _pad2(x.astype(x_mm_dtype), (Np, Dp))
    n_arr = jnp.array([N], dtype=jnp.int32)      # scalar prefetch: true batch size

    if use_hcache:
        # Pass 1 reuses the cached Linear1 output: pin the x block to the last
        # pass-0 tile so x is DMA'd from HBM exactly once over the whole grid.
        x_map = lambda p, i, n: (i * (1 - p) + (nnt - 1) * p, 0)
    else:
        x_map = lambda p, i, n: (i, 0)

    def resident(shape):
        return pl.BlockSpec(shape, lambda p, i, n: (0, 0),
                            pipeline_mode=pl.Buffered(1))

    scratch = [pltpu.VMEM((SUBLANE, Hp), jnp.float32),   # partial sums  -> scale (row 0)
               pltpu.VMEM((SUBLANE, Hp), jnp.float32)]   # partial sumsq -> shift (row 0)
    if use_hcache:
        scratch.append(pltpu.VMEM((nnt, tsel, Hp), jnp.float32))

    kernel = functools.partial(_predictor_tiled_kernel, tn=tsel, use_hcache=use_hcache)

    out_p = pl.pallas_call(
        kernel,
        out_shape=jax.ShapeDtypeStruct((Np, Pp), x.dtype),
        grid_spec=pltpu.PrefetchScalarGridSpec(
            num_scalar_prefetch=1,
            grid=(2, nnt),                                  # (pass, n_tile)
            in_specs=[
                pl.BlockSpec((tsel, Dp), x_map),            # x tile
                resident((Dp, Hp)),                         # w1 (pre-transposed)
                resident((1, Hp)),                          # gamma
                resident((1, Hp)),                          # beta
                resident((Hp, Pp)),                         # w2 (pre-transposed)
                resident((1, Pp)),                          # b2
            ],
            # During pass 0 the output block is pinned to tile 0 (never written,
            # never flushed) -> each output tile is written back to HBM exactly
            # once, in pass 1.
            out_specs=pl.BlockSpec((tsel, Pp), lambda p, i, n: (i * p, 0)),
            scratch_shapes=scratch,
        ),
        compiler_params=pltpu.CompilerParams(
            # Both axes must run sequentially: the pass axis orders stats before
            # apply, and the N axis accumulates into shared scratch.
            dimension_semantics=("arbitrary", "arbitrary"),
            vmem_limit_bytes=vmem_limit),
    )(n_arr, x_p, w1_p, gamma_p, beta_p, w2_p, b2_p)

    return out_p[:N, :P]


# --------------------------------------------------------------------------- #
# Init + pure-JAX reference
# --------------------------------------------------------------------------- #
def init_params(key, dim, prediction_size, prediction_hidden_size):
    """nn.Linear-style init (uniform +-1/sqrt(fan_in)); BN gamma=1, beta=0.
    Weights stored pre-transposed as (in, out). b1 is kept for the reference
    (the kernel skips it — train-mode BN cancels it exactly)."""
    k1, k2, k3, k4 = jax.random.split(key, 4)
    bound1 = 1.0 / jnp.sqrt(dim)
    bound2 = 1.0 / jnp.sqrt(prediction_hidden_size)
    return {
        "w1": jax.random.uniform(k1, (dim, prediction_hidden_size),
                                 minval=-bound1, maxval=bound1, dtype=jnp.float32),
        "b1": jax.random.uniform(k2, (1, prediction_hidden_size),
                                 minval=-bound1, maxval=bound1, dtype=jnp.float32),
        "gamma": jnp.ones((1, prediction_hidden_size), jnp.float32),
        "beta": jnp.zeros((1, prediction_hidden_size), jnp.float32),
        "w2": jax.random.uniform(k3, (prediction_hidden_size, prediction_size),
                                 minval=-bound2, maxval=bound2, dtype=jnp.float32),
        "b2": jax.random.uniform(k4, (1, prediction_size),
                                 minval=-bound2, maxval=bound2, dtype=jnp.float32),
    }


def reference_forward(x, params):
    """Pure-JAX reference of the PyTorch forward (train-mode BN, includes b1)."""
    h = x @ params["w1"] + params["b1"]
    mean = jnp.mean(h, axis=0, keepdims=True)
    var = jnp.mean((h - mean) ** 2, axis=0, keepdims=True)
    h = (h - mean) * jax.lax.rsqrt(var + BN_EPS) * params["gamma"] + params["beta"]
    h = jnp.maximum(h, 0.0)
    return h @ params["w2"] + params["b2"]


if __name__ == "__main__":
    # Small shapes consistent with Predictor(dim, prediction_size, hidden);
    # deliberately non-multiples of 8/128 to exercise every padding path.
    DIM, HIDDEN, PRED = 96, 192, 24

    key = jax.random.PRNGKey(0)
    kx1, kx2, kp = jax.random.split(key, 3)
    params = init_params(kp, DIM, PRED, HIDDEN)

    # 1) small batch -> single-step fast path.
    x_small = jax.random.normal(kx1, (50, DIM), dtype=jnp.float32)
    out_small = jax.block_until_ready(predictor_forward(x_small, params))
    ref_small = reference_forward(x_small, params)
    assert out_small.shape == (50, PRED)
    assert jnp.allclose(out_small, ref_small, atol=1e-4, rtol=1e-4), "fast path mismatch"

    # 2) larger batch -> tiled two-pass path with cached Linear1 output.
    x_big = jax.random.normal(kx2, (200, DIM), dtype=jnp.float32)
    ref_big = reference_forward(x_big, params)
    out_big = jax.block_until_ready(
        predictor_forward(x_big, params, force_tiled=True, tn=64))
    assert out_big.shape == (200, PRED)
    assert jnp.allclose(out_big, ref_big, atol=1e-4, rtol=1e-4), "tiled(h-cache) mismatch"

    # 3) tiled path with Linear1 recompute (h-cache disabled) -> exercises both branches.
    out_big2 = jax.block_until_ready(
        predictor_forward(x_big, params, force_tiled=True, tn=64, use_hcache=False))
    assert jnp.allclose(out_big2, ref_big, atol=1e-4, rtol=1e-4), "tiled(recompute) mismatch"

    print("KERNEL_OK")
</pallas_src>

<mosaic_0001>
module attributes {stable_mosaic.version = 11 : i64} {
  func.func @_predictor_single_kernel(%arg0: i32, %arg1: memref<56x128xf32, #tpu.memory_space<vmem>>, %arg2: memref<128x256xf32, #tpu.memory_space<vmem>>, %arg3: memref<1x256xf32, #tpu.memory_space<vmem>>, %arg4: memref<1x256xf32, #tpu.memory_space<vmem>>, %arg5: memref<256x128xf32, #tpu.memory_space<vmem>>, %arg6: memref<1x128xf32, #tpu.memory_space<vmem>>, %arg7: memref<56x128xf32, #tpu.memory_space<vmem>>) attributes {dimension_semantics = [#tpu.dimension_semantics<arbitrary>], iteration_bounds = array<i64: 1>, scalar_prefetch = 0 : i64, scratch_operands = 0 : i64, tpu.core_type = #tpu.core_type<tc>, window_params = [{pipeline_mode = #tpu.pipeline_mode<synchronous>, transform_indices = @transform_0, window_bounds = array<i64: 56, 128>}, {pipeline_mode = #tpu.pipeline_mode<synchronous>, transform_indices = @transform_1, window_bounds = array<i64: 128, 256>}, {pipeline_mode = #tpu.pipeline_mode<synchronous>, transform_indices = @transform_2, window_bounds = array<i64: 1, 256>}, {pipeline_mode = #tpu.pipeline_mode<synchronous>, transform_indices = @transform_3, window_bounds = array<i64: 1, 256>}, {pipeline_mode = #tpu.pipeline_mode<synchronous>, transform_indices = @transform_4, window_bounds = array<i64: 256, 128>}, {pipeline_mode = #tpu.pipeline_mode<synchronous>, transform_indices = @transform_5, window_bounds = array<i64: 1, 128>}, {pipeline_mode = #tpu.pipeline_mode<synchronous>, transform_indices = @transform_6, window_bounds = array<i64: 56, 128>}]} {
    %c0 = arith.constant 0 : index
    %c0_0 = arith.constant 0 : index
    %0 = vector.load %arg1[%c0, %c0_0] : memref<56x128xf32, #tpu.memory_space<vmem>>, vector<56x128xf32>
    %c0_1 = arith.constant 0 : index
    %c0_2 = arith.constant 0 : index
    %1 = vector.load %arg2[%c0_1, %c0_2] : memref<128x256xf32, #tpu.memory_space<vmem>>, vector<128x256xf32>
    %cst = arith.constant dense<0.000000e+00> : vector<56x256xf32>
    %2 = tpu.matmul %0, %1, %cst {dimension_numbers = #tpu.dot_dimension_numbers<[1], [0], [0], [1], [0, 0, 1, 1], [], []>} : vector<56x128xf32>, vector<128x256xf32>, vector<56x256xf32> -> vector<56x256xf32>
    %cst_3 = arith.constant dense<0.000000e+00> : vector<256xf32>
    %3 = vector.multi_reduction <add>, %2, %cst_3 [0] : vector<56x256xf32> to vector<256xf32>
    %4 = vector.shape_cast %3 : vector<256xf32> to vector<1x256xf32>
    %cst_4 = arith.constant 2.000000e-02 : f32
    %5 = vector.broadcast %cst_4 : f32 to vector<1x256xf32>
    %6 = arith.mulf %4, %5 : vector<1x256xf32>
    %7 = arith.mulf %2, %2 : vector<56x256xf32>
    %cst_5 = arith.constant dense<0.000000e+00> : vector<256xf32>
    %8 = vector.multi_reduction <add>, %7, %cst_5 [0] : vector<56x256xf32> to vector<256xf32>
    %9 = vector.shape_cast %8 : vector<256xf32> to vector<1x256xf32>
    %cst_6 = arith.constant 2.000000e-02 : f32
    %10 = vector.broadcast %cst_6 : f32 to vector<1x256xf32>
    %11 = arith.mulf %9, %10 : vector<1x256xf32>
    %12 = arith.mulf %6, %6 : vector<1x256xf32>
    %13 = arith.subf %11, %12 : vector<1x256xf32>
    %cst_7 = arith.constant 0.000000e+00 : f32
    %14 = vector.broadcast %cst_7 : f32 to vector<1x256xf32>
    %15 = arith.maximumf %13, %14 : vector<1x256xf32>
    %cst_8 = arith.constant 9.99999974E-6 : f32
    %16 = vector.broadcast %cst_8 : f32 to vector<1x256xf32>
    %17 = arith.addf %15, %16 : vector<1x256xf32>
    %18 = math.rsqrt %17 : vector<1x256xf32>
    %c0_9 = arith.constant 0 : index
    %c0_10 = arith.constant 0 : index
    %19 = vector.load %arg3[%c0_9, %c0_10] : memref<1x256xf32, #tpu.memory_space<vmem>>, vector<1x256xf32>
    %20 = arith.mulf %18, %19 : vector<1x256xf32>
    %c0_11 = arith.constant 0 : index
    %c0_12 = arith.constant 0 : index
    %21 = vector.load %arg4[%c0_11, %c0_12] : memref<1x256xf32, #tpu.memory_space<vmem>>, vector<1x256xf32>
    %22 = arith.mulf %6, %20 : vector<1x256xf32>
    %23 = arith.subf %21, %22 : vector<1x256xf32>
    %24 = vector.broadcast %20 : vector<1x256xf32> to vector<56x256xf32>
    %25 = arith.mulf %2, %24 : vector<56x256xf32>
    %26 = vector.broadcast %23 : vector<1x256xf32> to vector<56x256xf32>
    %27 = arith.addf %25, %26 : vector<56x256xf32>
    %cst_13 = arith.constant 0.000000e+00 : f32
    %28 = vector.broadcast %cst_13 : f32 to vector<56x256xf32>
    %29 = arith.maximumf %27, %28 : vector<56x256xf32>
    %c0_14 = arith.constant 0 : index
    %c0_15 = arith.constant 0 : index
    %30 = vector.load %arg5[%c0_14, %c0_15] : memref<256x128xf32, #tpu.memory_space<vmem>>, vector<256x128xf32>
    %cst_16 = arith.constant dense<0.000000e+00> : vector<56x128xf32>
    %31 = tpu.matmul %29, %30, %cst_16 {dimension_numbers = #tpu.dot_dimension_numbers<[1], [0], [0], [1], [0, 0, 1, 1], [], []>} : vector<56x256xf32>, vector<256x128xf32>, vector<56x128xf32> -> vector<56x128xf32>
    %c0_17 = arith.constant 0 : index
    %c0_18 = arith.constant 0 : index
    %32 = vector.load %arg6[%c0_17, %c0_18] : memref<1x128xf32, #tpu.memory_space<vmem>>, vector<1x128xf32>
    %33 = vector.broadcast %32 : vector<1x128xf32> to vector<56x128xf32>
    %34 = arith.addf %31, %33 : vector<56x128xf32>
    %c0_19 = arith.constant 0 : index
    %c0_20 = arith.constant 0 : index
    %35 = vector.load %arg7[%c0_19, %c0_20] : memref<56x128xf32, #tpu.memory_space<vmem>>, vector<56x128xf32>
    tpu.vector_store %arg7[%c0_19, %c0_20], %34 {strides = array<i32>} : memref<56x128xf32, #tpu.memory_space<vmem>>, vector<56x128xf32>,
    return
  }
  func.func @transform_0(%arg0: i32) -> (i32, i32) {
    %c0_i32 = arith.constant 0 : i32
    %c0_i32_0 = arith.constant 0 : i32
    %c0_i32_1 = arith.constant 0 : i32
    return %c0_i32, %c0_i32_0 : i32, i32
  }
  func.func @transform_1(%arg0: i32) -> (i32, i32) {
    %c0_i32 = arith.constant 0 : i32
    %c0_i32_0 = arith.constant 0 : i32
    %c0_i32_1 = arith.constant 0 : i32
    return %c0_i32, %c0_i32_0 : i32, i32
  }
  func.func @transform_2(%arg0: i32) -> (i32, i32) {
    %c0_i32 = arith.constant 0 : i32
    %c0_i32_0 = arith.constant 0 : i32
    %c0_i32_1 = arith.constant 0 : i32
    return %c0_i32, %c0_i32_0 : i32, i32
  }
  func.func @transform_3(%arg0: i32) -> (i32, i32) {
    %c0_i32 = arith.constant 0 : i32
    %c0_i32_0 = arith.constant 0 : i32
    %c0_i32_1 = arith.constant 0 : i32
    return %c0_i32, %c0_i32_0 : i32, i32
  }
  func.func @transform_4(%arg0: i32) -> (i32, i32) {
    %c0_i32 = arith.constant 0 : i32
    %c0_i32_0 = arith.constant 0 : i32
    %c0_i32_1 = arith.constant 0 : i32
    return %c0_i32, %c0_i32_0 : i32, i32
  }
  func.func @transform_5(%arg0: i32) -> (i32, i32) {
    %c0_i32 = arith.constant 0 : i32
    %c0_i32_0 = arith.constant 0 : i32
    %c0_i32_1 = arith.constant 0 : i32
    return %c0_i32, %c0_i32_0 : i32, i32
  }
  func.func @transform_6(%arg0: i32) -> (i32, i32) {
    %c0_i32 = arith.constant 0 : i32
    %c0_i32_0 = arith.constant 0 : i32
    %c0_i32_1 = arith.constant 0 : i32
    return %c0_i32, %c0_i32_0 : i32, i32
  }
}

</mosaic_0001>

<llo_original>
// kernel: tpu_custom_call.1
$region0: #{tpu_custom_call.1}
  #allocation0 [shape = 'u32[]', space=smem, size = 0x4, offset = 0x4, fixed_abs, tag = 'smem constant byte address 0x4 - core index']
  #allocation1 [shape = 'u32[144,128]{1,0:T(1,128)}', space=vmem, size = 0x12000, scoped, tag = 'internal scratch']
  %s0 = inlined_call_operand.hbm [shape: f32[56,128], index: 0, kind: input, shape index: {}]
  %s1 = inlined_call_operand.hbm [shape: f32[128,256], index: 1, kind: input, shape index: {}]
  %s2 = inlined_call_operand.vmem [shape: f32[1,256], index: 2, kind: input, shape index: {}]
  %s3 = inlined_call_operand.vmem [shape: f32[1,256], index: 3, kind: input, shape index: {}]
  %s4 = inlined_call_operand.hbm [shape: f32[256,128], index: 4, kind: input, shape index: {}]
  %s5 = inlined_call_operand.vmem [shape: f32[1,128], index: 5, kind: input, shape index: {}]
  %s6 = inlined_call_operand.hbm [shape: f32[56,128], index: 6, kind: output, shape index: {}]
  %s7 = sld [smem:[#allocation0]]
  $region46: #{tpu_custom_call.1} parent=0
    _
  %s9 = ssub.s32 1, %s7
  %s10 = scalar_select 0, %s9, %s7
  $region1: #{tpu_custom_call.1} parent=0
    #allocation2 [shape = 'u8[28672]{0}', space=vmem, size = 0x7000, scoped, tag = 'input window, operand 0, single buffered']
    #allocation3 [shape = 's32[1]{0}', space=sflag, size = 0x4, scoped, tag = 'scoped memory for tpu_custom_call.1']
    #allocation4 [shape = 's32[1]{0}', space=sflag, size = 0x4, scoped, tag = 'scoped memory for tpu_custom_call.1']
    #allocation5 [shape = 'u8[131072]{0}', space=vmem, size = 0x20000, scoped, tag = 'input window, operand 1, single buffered']
    #allocation6 [shape = 's32[1]{0}', space=sflag, size = 0x4, scoped, tag = 'scoped memory for tpu_custom_call.1']
    #allocation7 [shape = 'u8[131072]{0}', space=vmem, size = 0x20000, scoped, tag = 'input window, operand 4, single buffered']
    #allocation8 [shape = 'u8[28672]{0}', space=vmem, size = 0x7000, scoped, tag = 'output window, operand 0, single buffered']
    %11 = vsyncpa [#allocation3], 0
    %12 = vsyncpa [#allocation6], 0
    %13 = vsyncpa [#allocation4], 0
    // Predicated region
    $region2: #{tpu_custom_call.1} parent=1 // pred_check
      _
    $region3: #{tpu_custom_call.1} parent=1 // pred_check_branch
      %15 = sbr.rel (0) target = $region5
    $region4: #{tpu_custom_call.1} parent=1 // pred_region
      %s17 = ssub.s32 896, 896
      %18 = vsyncadd [#allocation3], %s17
      %s19 = sshll.u32 [#allocation2], 4
      %s20 = int_to_ptr.vmem [resolvable:$true] %s19
      %25 = dma.hbm_to_vmem [thread:$0]  %s0, 896, %s20, [#allocation3], 128, 128, 8
    $region5: #{tpu_custom_call.1} parent=1 // pred_fallthru
      _
    // Predicated region
    $region6: #{tpu_custom_call.1} parent=1 // pred_check
      _
    $region7: #{tpu_custom_call.1} parent=1 // pred_check_branch
      %27 = sbr.rel (0) target = $region9
    $region8: #{tpu_custom_call.1} parent=1 // pred_region
      %s29 = ssub.s32 4096, 4096
      %30 = vsyncadd [#allocation6], %s29
      %s31 = sshll.u32 [#allocation5], 4
      %s32 = int_to_ptr.vmem [resolvable:$true] %s31
      %37 = dma.hbm_to_vmem [thread:$0]  %s1, 4096, %s32, [#allocation6], 256, 256, 16
    $region9: #{tpu_custom_call.1} parent=1 // pred_fallthru
      _
    // Predicated region
    $region10: #{tpu_custom_call.1} parent=1 // pred_check
      _
    $region11: #{tpu_custom_call.1} parent=1 // pred_check_branch
      %39 = sbr.rel (0) target = $region13
    $region12: #{tpu_custom_call.1} parent=1 // pred_region
      _
    $region13: #{tpu_custom_call.1} parent=1 // pred_fallthru
      _
    // Predicated region
    $region14: #{tpu_custom_call.1} parent=1 // pred_check
      _
    $region15: #{tpu_custom_call.1} parent=1 // pred_check_branch
      %41 = sbr.rel (0) target = $region17
    $region16: #{tpu_custom_call.1} parent=1 // pred_region
      _
    $region17: #{tpu_custom_call.1} parent=1 // pred_fallthru
      _
    // Predicated region
    $region18: #{tpu_custom_call.1} parent=1 // pred_check
      _
    $region19: #{tpu_custom_call.1} parent=1 // pred_check_branch
      %43 = sbr.rel (0) target = $region21
    $region20: #{tpu_custom_call.1} parent=1 // pred_region
      %s45 = ssub.s32 4096, 4096
      %46 = vsyncadd [#allocation6], %s45
      %s47 = sshll.u32 [#allocation7], 4
      %s48 = int_to_ptr.vmem [resolvable:$true] %s47
      %53 = dma.hbm_to_vmem [thread:$0]  %s4, 4096, %s48, [#allocation6], 128, 128, 8
    $region21: #{tpu_custom_call.1} parent=1 // pred_fallthru
      _
    // Predicated region
    $region22: #{tpu_custom_call.1} parent=1 // pred_check
      _
    $region23: #{tpu_custom_call.1} parent=1 // pred_check_branch
      %55 = sbr.rel (0) target = $region25
    $region24: #{tpu_custom_call.1} parent=1 // pred_region
      _
    $region25: #{tpu_custom_call.1} parent=1 // pred_fallthru
      _
    // Predicated region
    $region26: #{tpu_custom_call.1} parent=1 // pred_check
      _
    $region27: #{tpu_custom_call.1} parent=1 // pred_check_branch
      %57 = sbr.rel (0) target = $region29
    $region28: #{tpu_custom_call.1} parent=1 // pred_region
      %58 = dma.done [#allocation3], 896
    $region29: #{tpu_custom_call.1} parent=1 // pred_fallthru
      _
    // Predicated region
    $region30: #{tpu_custom_call.1} parent=1 // pred_check
      _
    $region31: #{tpu_custom_call.1} parent=1 // pred_check_branch
      %60 = sbr.rel (0) target = $region33
    $region32: #{tpu_custom_call.1} parent=1 // pred_region
      %61 = dma.done [#allocation6], 4096
    $region33: #{tpu_custom_call.1} parent=1 // pred_fallthru
      _
    // Predicated region
    $region34: #{tpu_custom_call.1} parent=1 // pred_check
      _
    $region35: #{tpu_custom_call.1} parent=1 // pred_check_branch
      %63 = sbr.rel (0) target = $region37
    $region36: #{tpu_custom_call.1} parent=1 // pred_region
      %64 = dma.done [#allocation6], 4096
    $region37: #{tpu_custom_call.1} parent=1 // pred_fallthru
      _
    %v65 = vld [vmem:[#allocation2] sm:$0xff]
    %v66 = vld [vmem:[#allocation2 + $0x8] sm:$0xff]
    %v67 = vld [vmem:[#allocation2 + $0x10] sm:$0xff]
    %v68 = vld [vmem:[#allocation2 + $0x18] sm:$0xff]
    %v69 = vld [vmem:[#allocation2 + $0x20] sm:$0xff]
    %v70 = vld [vmem:[#allocation2 + $0x28] sm:$0xff]
    %v71 = vld [vmem:[#allocation2 + $0x30] sm:$0xff]
    %v72 = vld [vmem:[#allocation5] sm:$0xff]
    %v73 = vld [vmem:[#allocation5 + $0x8] sm:$0xff]
    %v74 = vld [vmem:[#allocation5 + $0x10] sm:$0xff]
    %v75 = vld [vmem:[#allocation5 + $0x18] sm:$0xff]
    %v76 = vld [vmem:[#allocation5 + $0x20] sm:$0xff]
    %v77 = vld [vmem:[#allocation5 + $0x28] sm:$0xff]
    %v78 = vld [vmem:[#allocation5 + $0x30] sm:$0xff]
    %v79 = vld [vmem:[#allocation5 + $0x38] sm:$0xff]
    %v80 = vld [vmem:[#allocation5 + $0x40] sm:$0xff]
    %v81 = vld [vmem:[#allocation5 + $0x48] sm:$0xff]
    %v82 = vld [vmem:[#allocation5 + $0x50] sm:$0xff]
    %v83 = vld [vmem:[#allocation5 + $0x58] sm:$0xff]
    %v84 = vld [vmem:[#allocation5 + $0x60] sm:$0xff]
    %v85 = vld [vmem:[#allocation5 + $0x68] sm:$0xff]
    %v86 = vld [vmem:[#allocation5 + $0x70] sm:$0xff]
    %v87 = vld [vmem:[#allocation5 + $0x78] sm:$0xff]
    %v88 = vld [vmem:[#allocation5 + $0x80] sm:$0xff]
    %v89 = vld [vmem:[#allocation5 + $0x88] sm:$0xff]
    %v90 = vld [vmem:[#allocation5 + $0x90] sm:$0xff]
    %v91 = vld [vmem:[#allocation5 + $0x98] sm:$0xff]
    %v92 = vld [vmem:[#allocation5 + $0xa0] sm:$0xff]
    %v93 = vld [vmem:[#allocation5 + $0xa8] sm:$0xff]
    %v94 = vld [vmem:[#allocation5 + $0xb0] sm:$0xff]
    %v95 = vld [vmem:[#allocation5 + $0xb8] sm:$0xff]
    %v96 = vld [vmem:[#allocation5 + $0xc0] sm:$0xff]
    %v97 = vld [vmem:[#allocation5 + $0xc8] sm:$0xff]
    %v98 = vld [vmem:[#allocation5 + $0xd0] sm:$0xff]
    %v99 = vld [vmem:[#allocation5 + $0xd8] sm:$0xff]
    %v100 = vld [vmem:[#allocation5 + $0xe0] sm:$0xff]
    %v101 = vld [vmem:[#allocation5 + $0xe8] sm:$0xff]
    %v102 = vld [vmem:[#allocation5 + $0xf0] sm:$0xff]
    %v103 = vld [vmem:[#allocation5 + $0xf8] sm:$0xff]
    %104 = vmatprep.subr.mxu0 %v73
    %105 = vmatpush1.msra.mxu0 %v72
    %106 = vmatprep.subr.mxu0 %v75
    %107 = vmatpush1.msra.mxu0 %v74
    %108 = vmatprep.subr.mxu0 %v77
    %109 = vmatpush1.msra.mxu0 %v76
    %110 = vmatprep.subr.mxu0 %v79
    %111 = vmatpush1.msra.mxu0 %v78
    %112 = vmatprep.subr.mxu0 %v81
    %113 = vmatpush1.msra.mxu0 %v80
    %114 = vmatprep.subr.mxu0 %v83
    %115 = vmatpush1.msra.mxu0 %v82
    %116 = vmatprep.subr.mxu0 %v85
    %117 = vmatpush1.msra.mxu0 %v84
    %118 = vmatprep.subr.mxu0 %v87
    %119 = vmatpush1.msra.mxu0 %v86
    %120 = vmatprep.subr.mxu0 %v89
    %121 = vmatpush1.msra.mxu0 %v88
    %122 = vmatprep.subr.mxu0 %v91
    %123 = vmatpush1.msra.mxu0 %v90
    %124 = vmatprep.subr.mxu0 %v93
    %125 = vmatpush1.msra.mxu0 %v92
    %126 = vmatprep.subr.mxu0 %v95
    %127 = vmatpush1.msra.mxu0 %v94
    %128 = vmatprep.subr.mxu0 %v97
    %129 = vmatpush1.msra.mxu0 %v96
    %130 = vmatprep.subr.mxu0 %v99
    %131 = vmatpush1.msra.mxu0 %v98
    %132 = vmatprep.subr.mxu0 %v101
    %133 = vmatpush1.msra.mxu0 %v100
    %134 = vmatprep.subr.mxu0 %v103
    %135 = vmatpush1.msra.mxu0 %v102
    %136 = vmatprep.subr.mxu0 0.0
    %137 = vmatpush1.msra.mxu0 0.0
    %138 = vmatprep.subr.mxu0 0.0
    %139 = vmatpush1.msra.mxu0 0.0
    %140 = vmatprep.subr.mxu0 0.0
    %141 = vmatpush1.msra.mxu0 0.0
    %142 = vmatprep.subr.mxu0 0.0
    %143 = vmatpush1.msra.mxu0 0.0
    %144 = vmatprep.subr.mxu0 0.0
    %145 = vmatpush1.msra.mxu0 0.0
    %146 = vmatprep.subr.mxu0 0.0
    %147 = vmatpush1.msra.mxu0 0.0
    %148 = vmatprep.subr.mxu0 0.0
    %149 = vmatpush1.msra.mxu0 0.0
    %150 = vmatprep.subr.mxu0 0.0
    %151 = vmatpush1.msra.mxu0 0.0
    %152 = vmatprep.subr.mxu0 0.0
    %153 = vmatpush1.msra.mxu0 0.0
    %154 = vmatprep.subr.mxu0 0.0
    %155 = vmatpush1.msra.mxu0 0.0
    %156 = vmatprep.subr.mxu0 0.0
    %157 = vmatpush1.msra.mxu0 0.0
    %158 = vmatprep.subr.mxu0 0.0
    %159 = vmatpush1.msra.mxu0 0.0
    %160 = vmatprep.subr.mxu0 0.0
    %161 = vmatpush1.msra.mxu0 0.0
    %162 = vmatprep.subr.mxu0 0.0
    %163 = vmatpush1.msra.mxu0 0.0
    %164 = vmatprep.subr.mxu0 0.0
    %165 = vmatpush1.msra.mxu0 0.0
    %166 = vmatprep.subr.mxu0 0.0
    %167 = vmatpush1.msra.mxu0 0.0
    %168 = vmatprep.mubr.f32.mxu0 0.0
    %169 = vmatmul.mubr.f32.gmra.mrb[0].mxu0 %v65
    %v170 = vpop.f32.mrb[0].mxu0
    %v171 = vadd.f32 0.0, %v170
    %v172 = vpop.f32.mrb[0].mxu0
    %v173 = vadd.f32 0.0, %v172
    %174 = vmatprep.mubr.f32.mxu0 0.0
    %175 = vmatmul.mubr.f32.gmra.mrb[0].mxu0 %v66
    %v176 = vpop.f32.mrb[0].mxu0
    %v177 = vadd.f32 0.0, %v176
    %v178 = vpop.f32.mrb[0].mxu0
    %v179 = vadd.f32 0.0, %v178
    %180 = vmatprep.mubr.f32.mxu0 0.0
    %181 = vmatmul.mubr.f32.gmra.mrb[0].mxu0 %v67
    %v182 = vpop.f32.mrb[0].mxu0
    %v183 = vadd.f32 0.0, %v182
    %v184 = vpop.f32.mrb[0].mxu0
    %v185 = vadd.f32 0.0, %v184
    %186 = vmatprep.mubr.f32.mxu0 0.0
    %187 = vmatmul.mubr.f32.gmra.mrb[0].mxu0 %v68
    %v188 = vpop.f32.mrb[0].mxu0
    %v189 = vadd.f32 0.0, %v188
    %v190 = vpop.f32.mrb[0].mxu0
    %v191 = vadd.f32 0.0, %v190
    %192 = vmatprep.mubr.f32.mxu0 0.0
    %193 = vmatmul.mubr.f32.gmra.mrb[0].mxu0 %v69
    %v194 = vpop.f32.mrb[0].mxu0
    %v195 = vadd.f32 0.0, %v194
    %v196 = vpop.f32.mrb[0].mxu0
    %v197 = vadd.f32 0.0, %v196
    %198 = vmatprep.mubr.f32.mxu0 0.0
    %199 = vmatmul.mubr.f32.gmra.mrb[0].mxu0 %v70
    %v200 = vpop.f32.mrb[0].mxu0
    %v201 = vadd.f32 0.0, %v200
    %v202 = vpop.f32.mrb[0].mxu0
    %v203 = vadd.f32 0.0, %v202
    %204 = vmatprep.mubr.f32.mxu0 0.0
    %205 = vmatmul.mubr.f32.gmra.mrb[0].mxu0 %v71
    %v206 = vpop.f32.mrb[0].mxu0
    %v207 = vadd.f32 0.0, %v206
    %v208 = vpop.f32.mrb[0].mxu0
    %v209 = vadd.f32 0.0, %v208
    %210 = vdwg.mxu0
    %v211 = vadd.f32 %v171, %v177
    %v212 = vadd.f32 %v211, %v183
    %v213 = vadd.f32 %v212, %v189
    %v214 = vadd.f32 %v213, %v195
    %v215 = vadd.f32 %v214, %v201
    %v216 = vadd.f32 %v215, %v207
    %v217 = vrot.slane %v216, 4
    %v218 = vadd.f32 %v216, %v217
    %v219 = vrot.slane %v218, 2
    %v220 = vadd.f32 %v218, %v219
    %v221 = vrot.slane %v220, 1
    %v222 = vadd.f32 %v220, %v221
    %v223 = vadd.f32 %v173, %v179
    %v224 = vadd.f32 %v223, %v185
    %v225 = vadd.f32 %v224, %v191
    %v226 = vadd.f32 %v225, %v197
    %v227 = vadd.f32 %v226, %v203
    %v228 = vadd.f32 %v227, %v209
    %v229 = vrot.slane %v228, 4
    %v230 = vadd.f32 %v228, %v229
    %v231 = vrot.slane %v230, 2
    %v232 = vadd.f32 %v230, %v231
    %v233 = vrot.slane %v232, 1
    %v234 = vadd.f32 %v232, %v233
    %v235 = vmul.f32 %v222, 0.02
    %v236 = vmul.f32 %v234, 0.02
    %v237 = vmul.f32 %v171, %v171
    %v238 = vmul.f32 %v173, %v173
    %v239 = vmul.f32 %v177, %v177
    %v240 = vmul.f32 %v179, %v179
    %v241 = vmul.f32 %v183, %v183
    %v242 = vmul.f32 %v185, %v185
    %v243 = vmul.f32 %v189, %v189
    %v244 = vmul.f32 %v191, %v191
    %v245 = vmul.f32 %v195, %v195
    %v246 = vmul.f32 %v197, %v197
    %v247 = vmul.f32 %v201, %v201
    %v248 = vmul.f32 %v203, %v203
    %v249 = vmul.f32 %v207, %v207
    %v250 = vmul.f32 %v209, %v209
    %v251 = vadd.f32 %v237, %v239
    %v252 = vadd.f32 %v251, %v241
    %v253 = vadd.f32 %v252, %v243
    %v254 = vadd.f32 %v253, %v245
    %v255 = vadd.f32 %v254, %v247
    %v256 = vadd.f32 %v255, %v249
    %v257 = vrot.slane %v256, 4
    %v258 = vadd.f32 %v256, %v257
    %v259 = vrot.slane %v258, 2
    %v260 = vadd.f32 %v258, %v259
    %v261 = vrot.slane %v260, 1
    %v262 = vadd.f32 %v260, %v261
    %v263 = vadd.f32 %v238, %v240
    %v264 = vadd.f32 %v263, %v242
    %v265 = vadd.f32 %v264, %v244
    %v266 = vadd.f32 %v265, %v246
    %v267 = vadd.f32 %v266, %v248
    %v268 = vadd.f32 %v267, %v250
    %v269 = vrot.slane %v268, 4
    %v270 = vadd.f32 %v268, %v269
    %v271 = vrot.slane %v270, 2
    %v272 = vadd.f32 %v270, %v271
    %v273 = vrot.slane %v272, 1
    %v274 = vadd.f32 %v272, %v273
    %v275 = vmul.f32 %v262, 0.02
    %v276 = vmul.f32 %v274, 0.02
    %v277 = vmul.f32 %v235, %v235
    %v278 = vmul.f32 %v236, %v236
    %v279 = vsub.f32 %v275, %v277
    %v280 = vsub.f32 %v276, %v278
    %v281 = vmax.f32 %v279, 0.0
    %v282 = vmax.f32 %v280, 0.0
    %v283 = vadd.f32 %v281, 1e-05
    %v284 = vadd.f32 %v282, 1e-05
    %v285 = vrsqrt.pop %v283
    %v286 = vrsqrt.pop %v284
    %v287 = vld [vmem:[%s2] sm:$0x3]
    %v289 = vlaneseq
    %v290 = vshrl.u32 %v289, 7
    %v291 = vsub.s32 0, %v290
    %v292 = vrot.slane %v287, %v291
    %v293 = vlaneseq
    %v294 = vshrl.u32 %v293, 7
    %v295 = vsub.s32 1, %v294
    %v296 = vrot.slane %v287, %v295
    %v299 = vmul.f32 %v285, %v292
    %v300 = vmul.f32 %v286, %v296
    %v301 = vld [vmem:[%s3] sm:$0x3]
    %v302 = vmul.f32 %v235, %v299
    %v303 = vmul.f32 %v236, %v300
    %v306 = vcombine.low %v302, %v303
    %v308 = vunpack.c.l.s4 1966171168
    %v309 = vunpack.c.0.s8 %v308
    %v310 = vlaneseq
    %v311 = vshrl.u32 %v310, 7
    %v312 = vsub.s32 %v309, %v311
    %v313 = vrot.slane %v306, %v312
    %v315 = vunpack.c.l.s4 1966171168
    %v316 = vunpack.c.0.s8 %v315
    %v317 = vlaneseq
    %v318 = vshrl.u32 %v317, 7
    %v319 = vsub.s32 %v316, %v318
    %v320 = vrot.slane %v313, %v319
    %v322 = vsub.f32 %v301, %v320
    %v323 = vlaneseq
    %v324 = vshrl.u32 %v323, 7
    %v325 = vsub.s32 0, %v324
    %v326 = vrot.slane %v299, %v325
    %v327 = vlaneseq
    %v328 = vshrl.u32 %v327, 7
    %v329 = vsub.s32 0, %v328
    %v330 = vrot.slane %v300, %v329
    %v331 = vmul.f32 %v171, %v326
    %v332 = vmul.f32 %v173, %v330
    %v333 = vmul.f32 %v177, %v326
    %v334 = vmul.f32 %v179, %v330
    %v335 = vmul.f32 %v183, %v326
    %v336 = vmul.f32 %v185, %v330
    %v337 = vmul.f32 %v189, %v326
    %v338 = vmul.f32 %v191, %v330
    %v339 = vmul.f32 %v195, %v326
    %v340 = vmul.f32 %v197, %v330
    %v341 = vmul.f32 %v201, %v326
    %v342 = vmul.f32 %v203, %v330
    %v343 = vmul.f32 %v207, %v326
    %v344 = vmul.f32 %v209, %v330
    %v346 = vlaneseq
    %v347 = vshrl.u32 %v346, 7
    %v348 = vsub.s32 0, %v347
    %v349 = vrot.slane %v322, %v348
    %v350 = vlaneseq
    %v351 = vshrl.u32 %v350, 7
    %v352 = vsub.s32 1, %v351
    %v353 = vrot.slane %v322, %v352
    %v356 = vadd.f32 %v331, %v349
    %v357 = vadd.f32 %v332, %v353
    %v358 = vadd.f32 %v333, %v349
    %v359 = vadd.f32 %v334, %v353
    %v360 = vadd.f32 %v335, %v349
    %v361 = vadd.f32 %v336, %v353
    %v362 = vadd.f32 %v337, %v349
    %v363 = vadd.f32 %v338, %v353
    %v364 = vadd.f32 %v339, %v349
    %v365 = vadd.f32 %v340, %v353
    %v366 = vadd.f32 %v341, %v349
    %v367 = vadd.f32 %v342, %v353
    %v368 = vadd.f32 %v343, %v349
    %v369 = vadd.f32 %v344, %v353
    %v370 = vmax.f32 %v356, 0.0
    %v371 = vmax.f32 %v357, 0.0
    %v372 = vmax.f32 %v358, 0.0
    %v373 = vmax.f32 %v359, 0.0
    %v374 = vmax.f32 %v360, 0.0
    %v375 = vmax.f32 %v361, 0.0
    %v376 = vmax.f32 %v362, 0.0
    %v377 = vmax.f32 %v363, 0.0
    %v378 = vmax.f32 %v364, 0.0
    %v379 = vmax.f32 %v365, 0.0
    %v380 = vmax.f32 %v366, 0.0
    %v381 = vmax.f32 %v367, 0.0
    %v382 = vmax.f32 %v368, 0.0
    %v383 = vmax.f32 %v369, 0.0
    %v384 = vld [vmem:[#allocation7] sm:$0xff]
    %v385 = vld [vmem:[#allocation7 + $0x8] sm:$0xff]
    %v386 = vld [vmem:[#allocation7 + $0x10] sm:$0xff]
    %v387 = vld [vmem:[#allocation7 + $0x18] sm:$0xff]
    %v388 = vld [vmem:[#allocation7 + $0x20] sm:$0xff]
    %v389 = vld [vmem:[#allocation7 + $0x28] sm:$0xff]
    %v390 = vld [vmem:[#allocation7 + $0x30] sm:$0xff]
    %v391 = vld [vmem:[#allocation7 + $0x38] sm:$0xff]
    %v392 = vld [vmem:[#allocation7 + $0x40] sm:$0xff]
    %v393 = vld [vmem:[#allocation7 + $0x48] sm:$0xff]
    %v394 = vld [vmem:[#allocation7 + $0x50] sm:$0xff]
    %v395 = vld [vmem:[#allocation7 + $0x58] sm:$0xff]
    %v396 = vld [vmem:[#allocation7 + $0x60] sm:$0xff]
    %v397 = vld [vmem:[#allocation7 + $0x68] sm:$0xff]
    %v398 = vld [vmem:[#allocation7 + $0x70] sm:$0xff]
    %v399 = vld [vmem:[#allocation7 + $0x78] sm:$0xff]
    %v400 = vld [vmem:[#allocation7 + $0x80] sm:$0xff]
    %v401 = vld [vmem:[#allocation7 + $0x88] sm:$0xff]
    %v402 = vld [vmem:[#allocation7 + $0x90] sm:$0xff]
    %v403 = vld [vmem:[#allocation7 + $0x98] sm:$0xff]
    %v404 = vld [vmem:[#allocation7 + $0xa0] sm:$0xff]
    %v405 = vld [vmem:[#allocation7 + $0xa8] sm:$0xff]
    %v406 = vld [vmem:[#allocation7 + $0xb0] sm:$0xff]
    %v407 = vld [vmem:[#allocation7 + $0xb8] sm:$0xff]
    %v408 = vld [vmem:[#allocation7 + $0xc0] sm:$0xff]
    %v409 = vld [vmem:[#allocation7 + $0xc8] sm:$0xff]
    %v410 = vld [vmem:[#allocation7 + $0xd0] sm:$0xff]
    %v411 = vld [vmem:[#allocation7 + $0xd8] sm:$0xff]
    %v412 = vld [vmem:[#allocation7 + $0xe0] sm:$0xff]
    %v413 = vld [vmem:[#allocation7 + $0xe8] sm:$0xff]
    %v414 = vld [vmem:[#allocation7 + $0xf0] sm:$0xff]
    %v415 = vld [vmem:[#allocation7 + $0xf8] sm:$0xff]
    %v416 = vld [vmem:[%s5] sm:$0x1]
    %v418 = vlaneseq
    %v419 = vshrl.u32 %v418, 7
    %v420 = vsub.s32 0, %v419
    %v421 = vrot.slane %v416, %v420
    %423 = vmatprep.subr.mxu0 0.0
    %424 = vmatpush1.msra.mxu0 %v384
    %425 = vmatprep.subr.mxu0 0.0
    %426 = vmatpush1.msra.mxu0 %v385
    %427 = vmatprep.subr.mxu0 0.0
    %428 = vmatpush1.msra.mxu0 %v386
    %429 = vmatprep.subr.mxu0 0.0
    %430 = vmatpush1.msra.mxu0 %v387
    %431 = vmatprep.subr.mxu0 0.0
    %432 = vmatpush1.msra.mxu0 %v388
    %433 = vmatprep.subr.mxu0 0.0
    %434 = vmatpush1.msra.mxu0 %v389
    %435 = vmatprep.subr.mxu0 0.0
    %436 = vmatpush1.msra.mxu0 %v390
    %437 = vmatprep.subr.mxu0 0.0
    %438 = vmatpush1.msra.mxu0 %v391
    %439 = vmatprep.subr.mxu0 0.0
    %440 = vmatpush1.msra.mxu0 %v392
    %441 = vmatprep.subr.mxu0 0.0
    %442 = vmatpush1.msra.mxu0 %v393
    %443 = vmatprep.subr.mxu0 0.0
    %444 = vmatpush1.msra.mxu0 %v394
    %445 = vmatprep.subr.mxu0 0.0
    %446 = vmatpush1.msra.mxu0 %v395
    %447 = vmatprep.subr.mxu0 0.0
    %448 = vmatpush1.msra.mxu0 %v396
    %449 = vmatprep.subr.mxu0 0.0
    %450 = vmatpush1.msra.mxu0 %v397
    %451 = vmatprep.subr.mxu0 0.0
    %452 = vmatpush1.msra.mxu0 %v398
    %453 = vmatprep.subr.mxu0 0.0
    %454 = vmatpush1.msra.mxu0 %v399
    %455 = vmatprep.subr.mxu0 0.0
    %456 = vmatpush1.msra.mxu0 %v400
    %457 = vmatprep.subr.mxu0 0.0
    %458 = vmatpush1.msra.mxu0 %v401
    %459 = vmatprep.subr.mxu0 0.0
    %460 = vmatpush1.msra.mxu0 %v402
    %461 = vmatprep.subr.mxu0 0.0
    %462 = vmatpush1.msra.mxu0 %v403
    %463 = vmatprep.subr.mxu0 0.0
    %464 = vmatpush1.msra.mxu0 %v404
    %465 = vmatprep.subr.mxu0 0.0
    %466 = vmatpush1.msra.mxu0 %v405
    %467 = vmatprep.subr.mxu0 0.0
    %468 = vmatpush1.msra.mxu0 %v406
    %469 = vmatprep.subr.mxu0 0.0
    %470 = vmatpush1.msra.mxu0 %v407
    %471 = vmatprep.subr.mxu0 0.0
    %472 = vmatpush1.msra.mxu0 %v408
    %473 = vmatprep.subr.mxu0 0.0
    %474 = vmatpush1.msra.mxu0 %v409
    %475 = vmatprep.subr.mxu0 0.0
    %476 = vmatpush1.msra.mxu0 %v410
    %477 = vmatprep.subr.mxu0 0.0
    %478 = vmatpush1.msra.mxu0 %v411
    %479 = vmatprep.subr.mxu0 0.0
    %480 = vmatpush1.msra.mxu0 %v412
    %481 = vmatprep.subr.mxu0 0.0
    %482 = vmatpush1.msra.mxu0 %v413
    %483 = vmatprep.subr.mxu0 0.0
    %484 = vmatpush1.msra.mxu0 %v414
    %485 = vmatprep.subr.mxu0 0.0
    %486 = vmatpush1.msra.mxu0 %v415
    %487 = vmatprep.mubr.f32.mxu0 %v371
    %488 = vmatmul.mubr.f32.gmra.mrb[0].mxu0 %v370
    %v489 = vpop.f32.mrb[0].mxu0
    %v490 = vadd.f32 %v421, %v489
    %v491 = vpop.f32.mrb[0].mxu0
    %492 = vmatprep.mubr.f32.mxu0 %v373
    %493 = vmatmul.mubr.f32.gmra.mrb[0].mxu0 %v372
    %v494 = vpop.f32.mrb[0].mxu0
    %v495 = vadd.f32 %v421, %v494
    %v496 = vpop.f32.mrb[0].mxu0
    %497 = vmatprep.mubr.f32.mxu0 %v375
    %498 = vmatmul.mubr.f32.gmra.mrb[0].mxu0 %v374
    %v499 = vpop.f32.mrb[0].mxu0
    %v500 = vadd.f32 %v421, %v499
    %v501 = vpop.f32.mrb[0].mxu0
    %502 = vmatprep.mubr.f32.mxu0 %v377
    %503 = vmatmul.mubr.f32.gmra.mrb[0].mxu0 %v376
    %v504 = vpop.f32.mrb[0].mxu0
    %v505 = vadd.f32 %v421, %v504
    %v506 = vpop.f32.mrb[0].mxu0
    %507 = vmatprep.mubr.f32.mxu0 %v379
    %508 = vmatmul.mubr.f32.gmra.mrb[0].mxu0 %v378
    %v509 = vpop.f32.mrb[0].mxu0
    %v510 = vadd.f32 %v421, %v509
    %v511 = vpop.f32.mrb[0].mxu0
    %512 = vmatprep.mubr.f32.mxu0 %v381
    %513 = vmatmul.mubr.f32.gmra.mrb[0].mxu0 %v380
    %v514 = vpop.f32.mrb[0].mxu0
    %v515 = vadd.f32 %v421, %v514
    %v516 = vpop.f32.mrb[0].mxu0
    %517 = vmatprep.mubr.f32.mxu0 %v383
    %518 = vmatmul.mubr.f32.gmra.mrb[0].mxu0 %v382
    %v519 = vpop.f32.mrb[0].mxu0
    %v520 = vadd.f32 %v421, %v519
    %v521 = vpop.f32.mrb[0].mxu0
    %522 = vdwg.mxu0
    %523 = vst [vmem:[#allocation8] sm:$0xff] %v490
    %524 = vst [vmem:[#allocation8 + $0x8] sm:$0xff] %v495
    %525 = vst [vmem:[#allocation8 + $0x10] sm:$0xff] %v500
    %526 = vst [vmem:[#allocation8 + $0x18] sm:$0xff] %v505
    %527 = vst [vmem:[#allocation8 + $0x20] sm:$0xff] %v510
    %528 = vst [vmem:[#allocation8 + $0x28] sm:$0xff] %v515
    %529 = vst [vmem:[#allocation8 + $0x30] sm:$0xff] %v520
    // Predicated region
    $region38: #{tpu_custom_call.1} parent=1 // pred_check
      _
    $region39: #{tpu_custom_call.1} parent=1 // pred_check_branch
      %531 = sbr.rel (0) target = $region41
    $region40: #{tpu_custom_call.1} parent=1 // pred_region
      %s533 = ssub.s32 896, 896
      %534 = vsyncadd [#allocation4], %s533
      %s535 = sshll.u32 [#allocation8], 4
      %s536 = int_to_ptr.vmem [resolvable:$true] %s535
      %541 = dma.vmem_to_hbm [thread:$0]  %s536, 896, %s6, [#allocation4], 128, 128, 8
    $region41: #{tpu_custom_call.1} parent=1 // pred_fallthru
      _
    // Predicated region
    $region42: #{tpu_custom_call.1} parent=1 // pred_check
      _
    $region43: #{tpu_custom_call.1} parent=1 // pred_check_branch
      %543 = sbr.rel (0) target = $region45
    $region44: #{tpu_custom_call.1} parent=1 // pred_region
      %544 = dma.done [#allocation4], 896
    $region45: #{tpu_custom_call.1} parent=1 // pred_fallthru
      _
    %545 = vsyncpa [#allocation3], 1
    %546 = vsyncpa [#allocation6], 1
    %547 = vsyncpa [#allocation4], 1

</llo_original>
